<compile_context>
chip_gen: v5e
topology: v5e:2x2
jax: 0.10.0
libtpu: 0.0.40
codegen_flags: <defaults>
</compile_context>

<pallas_src>
import jax
import jax.numpy as jnp
from jax.experimental import pallas as pl
from jax.experimental.pallas import tpu as pltpu

LANE = 128
SUBLANE = 8


def affine_kernel(x_ref, w_ref, b_ref, o_ref):
    """One batch tile: y = x @ W + b, written to a lane-dense (128-wide) slab."""
    acc = jnp.dot(x_ref[...], w_ref[...], preferred_element_type=jnp.float32)
    # Bias add / epilogue kept in f32 (VPU-safe on v5e even if operands are bf16).
    o_ref[...] = (acc + b_ref[...]).astype(o_ref.dtype)


def _round_up(x, m):
    return ((x + m - 1) // m) * m


def prepare_params(params, compute_dtype=jnp.float32):
    """One-time parameter prep (do NOT call per forward).

    params: dict with wN of shape [out, in] (PyTorch nn.Linear layout), bN [out].
    Collapses the activation-free chain into one affine map, transposes to
    [in, out], and pads the output dim to a lane-dense multiple of 128.
    compute_dtype=jnp.bfloat16 halves HBM traffic on v6e/v7x (accum stays f32).
    """
    W = jnp.asarray(params["w1"], jnp.float32).T          # [in, h]
    b = jnp.asarray(params["b1"], jnp.float32)
    for i in (2, 3, 4):
        Wi = jnp.asarray(params[f"w{i}"], jnp.float32).T
        W = W @ Wi
        b = b @ Wi + jnp.asarray(params[f"b{i}"], jnp.float32)
    in_size, out_size = W.shape
    out_pad = _round_up(max(out_size, LANE), LANE)
    W_pad = jnp.zeros((in_size, out_pad), jnp.float32).at[:, :out_size].set(W)
    b_pad = jnp.zeros((1, out_pad), jnp.float32).at[:, :out_size].set(b)
    return {
        "W": W_pad.astype(compute_dtype),   # [in, out_pad], MXU operand dtype
        "b": b_pad,                          # [1, out_pad], always f32
        "in_size": in_size,
        "out_size": out_size,
    }


def mnist_classifier_forward(x, prepped, tile_b=None):
    """x: [B, input_size] f32.  Returns [B, output_size] f32."""
    B, in_size = x.shape
    assert in_size == prepped["in_size"]
    W, b = prepped["W"], prepped["b"]
    out_pad = W.shape[1]

    # Batch tile: large enough to hit the HBM roofline plateau, small enough
    # that double-buffered tiles fit v7x's tighter VMEM budget.
    if tile_b is None:
        tile_b = min(2048, _round_up(B, SUBLANE))
    tile_b = _round_up(tile_b, SUBLANE)
    Bp = _round_up(B, tile_b)

    x_pad = x.astype(W.dtype)
    if Bp != B:
        x_pad = jnp.zeros((Bp, in_size), W.dtype).at[:B].set(x_pad)

    out = pl.pallas_call(
        affine_kernel,
        out_shape=jax.ShapeDtypeStruct((Bp, out_pad), jnp.float32),
        grid_spec=pltpu.PrefetchScalarGridSpec(
            num_scalar_prefetch=0,
            grid=(Bp // tile_b,),
            in_specs=[
                pl.BlockSpec((tile_b, in_size), lambda i: (i, 0)),   # x tile
                pl.BlockSpec((in_size, out_pad), lambda i: (0, 0)),  # W: VMEM-resident
                pl.BlockSpec((1, out_pad), lambda i: (0, 0)),        # b: VMEM-resident
            ],
            out_specs=pl.BlockSpec((tile_b, out_pad), lambda i: (i, 0)),
        ),
        compiler_params=pltpu.CompilerParams(
            dimension_semantics=("parallel",),
        ),
    )(x_pad, W, b)

    return out[:B, :prepped["out_size"]]


def init_params(key, input_size, hidden_size, output_size):
    """Deterministic init mirroring nn.Linear shapes (PyTorch default uniform)."""
    dims = [(hidden_size, input_size),
            (hidden_size, hidden_size),
            (hidden_size, hidden_size),
            (output_size, hidden_size)]
    params = {}
    for i, (out_d, in_d) in enumerate(dims, start=1):
        key, kw, kb = jax.random.split(key, 3)
        bound = 1.0 / (in_d ** 0.5)
        params[f"w{i}"] = jax.random.uniform(kw, (out_d, in_d), jnp.float32,
                                             minval=-bound, maxval=bound)
        params[f"b{i}"] = jax.random.uniform(kb, (out_d,), jnp.float32,
                                             minval=-bound, maxval=bound)
    return params


if __name__ == "__main__":
    input_size, hidden_size, output_size = 64, 32, 10

    key = jax.random.PRNGKey(0)
    key, kx1, kx2 = jax.random.split(key, 3)
    params = init_params(key, input_size, hidden_size, output_size)

    # One-time parameter preparation (layer collapse + transpose + lane padding).
    prepped = prepare_params(params)  # use compute_dtype=jnp.bfloat16 on v6e/v7x

    def torch_ref(x):
        # Pure-JAX reference of the original 4-layer forward: x @ W_i.T + b_i.
        h = x
        for i in (1, 2, 3, 4):
            h = h @ params[f"w{i}"].T + params[f"b{i}"]
        return h

    # Case 1: small batch, single grid step.
    x1 = jax.random.normal(kx1, (8, input_size), jnp.float32)
    out1 = jax.block_until_ready(mnist_classifier_forward(x1, prepped))
    assert out1.shape == (8, output_size)
    assert jnp.allclose(out1, torch_ref(x1), atol=1e-4, rtol=1e-4)

    # Case 2: batch not a multiple of the tile, forced multi-step grid.
    x2 = jax.random.normal(kx2, (20, input_size), jnp.float32)
    out2 = jax.block_until_ready(mnist_classifier_forward(x2, prepped, tile_b=8))
    assert out2.shape == (20, output_size)
    assert jnp.allclose(out2, torch_ref(x2), atol=1e-4, rtol=1e-4)

    print("KERNEL_OK")
</pallas_src>

<mosaic_0001>
module attributes {stable_mosaic.version = 11 : i64} {
  func.func @affine_kernel(%arg0: i32, %arg1: memref<8x64xf32, #tpu.memory_space<vmem>>, %arg2: memref<64x128xf32, #tpu.memory_space<vmem>>, %arg3: memref<1x128xf32, #tpu.memory_space<vmem>>, %arg4: memref<8x128xf32, #tpu.memory_space<vmem>>) attributes {dimension_semantics = [#tpu.dimension_semantics<parallel>], iteration_bounds = array<i64: 1>, scalar_prefetch = 0 : i64, scratch_operands = 0 : i64, tpu.core_type = #tpu.core_type<tc>, window_params = [{transform_indices = @transform_0, window_bounds = array<i64: 8, 64>}, {pipeline_mode = #tpu.pipeline_mode<synchronous>, transform_indices = @transform_1, window_bounds = array<i64: 64, 128>}, {pipeline_mode = #tpu.pipeline_mode<synchronous>, transform_indices = @transform_2, window_bounds = array<i64: 1, 128>}, {transform_indices = @transform_3, window_bounds = array<i64: 8, 128>}]} {
    %c0 = arith.constant 0 : index
    %c0_0 = arith.constant 0 : index
    %0 = vector.load %arg1[%c0, %c0_0] : memref<8x64xf32, #tpu.memory_space<vmem>>, vector<8x64xf32>
    %c0_1 = arith.constant 0 : index
    %c0_2 = arith.constant 0 : index
    %1 = vector.load %arg2[%c0_1, %c0_2] : memref<64x128xf32, #tpu.memory_space<vmem>>, vector<64x128xf32>
    %cst = arith.constant dense<0.000000e+00> : vector<8x128xf32>
    %2 = tpu.matmul %0, %1, %cst {dimension_numbers = #tpu.dot_dimension_numbers<[1], [0], [0], [1], [0, 0, 1, 1], [], []>} : vector<8x64xf32>, vector<64x128xf32>, vector<8x128xf32> -> vector<8x128xf32>
    %c0_3 = arith.constant 0 : index
    %c0_4 = arith.constant 0 : index
    %3 = vector.load %arg3[%c0_3, %c0_4] : memref<1x128xf32, #tpu.memory_space<vmem>>, vector<1x128xf32>
    %4 = vector.broadcast %3 : vector<1x128xf32> to vector<8x128xf32>
    %5 = arith.addf %2, %4 : vector<8x128xf32>
    %c0_5 = arith.constant 0 : index
    %c0_6 = arith.constant 0 : index
    %6 = vector.load %arg4[%c0_5, %c0_6] : memref<8x128xf32, #tpu.memory_space<vmem>>, vector<8x128xf32>
    tpu.vector_store %arg4[%c0_5, %c0_6], %5 {strides = array<i32>} : memref<8x128xf32, #tpu.memory_space<vmem>>, vector<8x128xf32>,
    return
  }
  func.func @transform_0(%arg0: i32) -> (i32, i32) {
    %c0_i32 = arith.constant 0 : i32
    %c0_i32_0 = arith.constant 0 : i32
    return %arg0, %c0_i32 : i32, i32
  }
  func.func @transform_1(%arg0: i32) -> (i32, i32) {
    %c0_i32 = arith.constant 0 : i32
    %c0_i32_0 = arith.constant 0 : i32
    %c0_i32_1 = arith.constant 0 : i32
    return %c0_i32, %c0_i32_0 : i32, i32
  }
  func.func @transform_2(%arg0: i32) -> (i32, i32) {
    %c0_i32 = arith.constant 0 : i32
    %c0_i32_0 = arith.constant 0 : i32
    %c0_i32_1 = arith.constant 0 : i32
    return %c0_i32, %c0_i32_0 : i32, i32
  }
  func.func @transform_3(%arg0: i32) -> (i32, i32) {
    %c0_i32 = arith.constant 0 : i32
    %c0_i32_0 = arith.constant 0 : i32
    return %arg0, %c0_i32 : i32, i32
  }
}

</mosaic_0001>

<llo_original>
// kernel: tpu_custom_call.1
$region0: #{tpu_custom_call.1}
  #allocation0 [shape = 'u32[]', space=smem, size = 0x4, offset = 0x4, fixed_abs, tag = 'smem constant byte address 0x4 - core index']
  #allocation1 [shape = 'u32[72,128]{1,0:T(1,128)}', space=vmem, size = 0x9000, scoped, tag = 'internal scratch']
  %s0 = inlined_call_operand.hbm [shape: f32[8,64], index: 0, kind: input, shape index: {}]
  %s1 = inlined_call_operand.hbm [shape: f32[64,128], index: 1, kind: input, shape index: {}]
  %s2 = inlined_call_operand.vmem [shape: f32[1,128], index: 2, kind: input, shape index: {}]
  %s3 = inlined_call_operand.hbm [shape: f32[8,128], index: 3, kind: output, shape index: {}]
  %s4 = sld [smem:[#allocation0]]
  $region30: #{tpu_custom_call.1} parent=0
    _
  %s6 = ssub.s32 1, %s4
  %s7 = scalar_select 0, %s6, %s4
  $region1: #{tpu_custom_call.1} parent=0
    #allocation2 [shape = 'u8[4096]{0}', space=vmem, size = 0x1000, scoped, tag = 'input window, operand 0, single buffered']
    #allocation3 [shape = 's32[1]{0}', space=sflag, size = 0x4, scoped, tag = 'scoped memory for tpu_custom_call.1']
    #allocation4 [shape = 's32[1]{0}', space=sflag, size = 0x4, scoped, tag = 'scoped memory for tpu_custom_call.1']
    #allocation5 [shape = 'u8[32768]{0}', space=vmem, size = 0x8000, scoped, tag = 'input window, operand 1, single buffered']
    #allocation6 [shape = 's32[1]{0}', space=sflag, size = 0x4, scoped, tag = 'scoped memory for tpu_custom_call.1']
    #allocation7 [shape = 'u8[4096]{0}', space=vmem, size = 0x1000, scoped, tag = 'output window, operand 0, single buffered']
    %8 = vsyncpa [#allocation3], 0
    %9 = vsyncpa [#allocation6], 0
    %10 = vsyncpa [#allocation4], 0
    // Predicated region
    $region2: #{tpu_custom_call.1} parent=1 // pred_check
      _
    $region3: #{tpu_custom_call.1} parent=1 // pred_check_branch
      %12 = sbr.rel (0) target = $region5
    $region4: #{tpu_custom_call.1} parent=1 // pred_region
      %14 = vsyncadd [#allocation3], 0
      %s16 = sshll.u32 %s0, 4
      %s17 = int_to_ptr.hbm [resolvable:$true] %s16
      %s18 = sshll.u32 [#allocation2], 4
      %s19 = int_to_ptr.vmem [resolvable:$true] %s18
      %21 = dma.hbm_to_vmem [thread:$0]  %s17, 128, %s19, [#allocation3]
    $region5: #{tpu_custom_call.1} parent=1 // pred_fallthru
      _
    // Predicated region
    $region6: #{tpu_custom_call.1} parent=1 // pred_check
      _
    $region7: #{tpu_custom_call.1} parent=1 // pred_check_branch
      %23 = sbr.rel (0) target = $region9
    $region8: #{tpu_custom_call.1} parent=1 // pred_region
      %25 = vsyncadd [#allocation6], 0
      %s26 = sshll.u32 %s1, 4
      %s27 = int_to_ptr.hbm [resolvable:$true] %s26
      %s28 = sshll.u32 [#allocation5], 4
      %s29 = int_to_ptr.vmem [resolvable:$true] %s28
      %34 = dma.hbm_to_vmem [thread:$0]  %s27, 1024, %s29, [#allocation6], 128, 128, 8
    $region9: #{tpu_custom_call.1} parent=1 // pred_fallthru
      _
    // Predicated region
    $region10: #{tpu_custom_call.1} parent=1 // pred_check
      _
    $region11: #{tpu_custom_call.1} parent=1 // pred_check_branch
      %36 = sbr.rel (0) target = $region13
    $region12: #{tpu_custom_call.1} parent=1 // pred_region
      _
    $region13: #{tpu_custom_call.1} parent=1 // pred_fallthru
      _
    // Predicated region
    $region14: #{tpu_custom_call.1} parent=1 // pred_check
      _
    $region15: #{tpu_custom_call.1} parent=1 // pred_check_branch
      %38 = sbr.rel (0) target = $region17
    $region16: #{tpu_custom_call.1} parent=1 // pred_region
      %40 = dma.done [#allocation3], 128
    $region17: #{tpu_custom_call.1} parent=1 // pred_fallthru
      _
    // Predicated region
    $region18: #{tpu_custom_call.1} parent=1 // pred_check
      _
    $region19: #{tpu_custom_call.1} parent=1 // pred_check_branch
      %42 = sbr.rel (0) target = $region21
    $region20: #{tpu_custom_call.1} parent=1 // pred_region
      %44 = dma.done [#allocation6], 1024
    $region21: #{tpu_custom_call.1} parent=1 // pred_fallthru
      _
    %v45 = vld [vmem:[#allocation2] sm:$0xff]
    %v46 = vld [vmem:[#allocation5] sm:$0xff]
    %v47 = vld [vmem:[#allocation5 + $0x8] sm:$0xff]
    %v48 = vld [vmem:[#allocation5 + $0x10] sm:$0xff]
    %v49 = vld [vmem:[#allocation5 + $0x18] sm:$0xff]
    %v50 = vld [vmem:[#allocation5 + $0x20] sm:$0xff]
    %v51 = vld [vmem:[#allocation5 + $0x28] sm:$0xff]
    %v52 = vld [vmem:[#allocation5 + $0x30] sm:$0xff]
    %v53 = vld [vmem:[#allocation5 + $0x38] sm:$0xff]
    %v54 = vld [vmem:[%s2] sm:$0x1]
    %v56 = vperm.slane %v54, 0
    %vm58 = vcmask 523264
    %v60 = vsel %vm58, %v45, 0
    %62 = vmatpush.msra.mxu0 0.0
    %63 = vmatpush.msra.mxu0 0.0
    %64 = vmatpush.msra.mxu0 0.0
    %65 = vmatpush.msra.mxu0 0.0
    %66 = vmatpush.msra.mxu0 0.0
    %67 = vmatpush.msra.mxu0 0.0
    %68 = vmatpush.msra.mxu0 0.0
    %69 = vmatpush.msra.mxu0 0.0
    %70 = vmatpush.msra.mxu0 %v53
    %71 = vmatpush.msra.mxu0 %v52
    %72 = vmatpush.msra.mxu0 %v51
    %73 = vmatpush.msra.mxu0 %v50
    %74 = vmatpush.msra.mxu0 %v49
    %75 = vmatpush.msra.mxu0 %v48
    %76 = vmatpush.msra.mxu0 %v47
    %77 = vmatpush.msra.mxu0 %v46
    %78 = vmatmul.f32.gmra.mxu0 %v60
    %v79 = vpop.f32.mrf.mxu0
    %v80 = vadd.f32 %v56, %v79
    %81 = vdwg.mxu0
    %82 = vst [vmem:[#allocation7] sm:$0xff] %v80
    // Predicated region
    $region22: #{tpu_custom_call.1} parent=1 // pred_check
      _
    $region23: #{tpu_custom_call.1} parent=1 // pred_check_branch
      %84 = sbr.rel (0) target = $region25
    $region24: #{tpu_custom_call.1} parent=1 // pred_region
      %86 = vsyncadd [#allocation4], 0
      %s88 = sshll.u32 [#allocation7], 4
      %s89 = int_to_ptr.vmem [resolvable:$true] %s88
      %s90 = sshll.u32 %s3, 4
      %s91 = int_to_ptr.hbm [resolvable:$true] %s90
      %93 = dma.vmem_to_hbm [thread:$0]  %s89, 128, %s91, [#allocation4]
    $region25: #{tpu_custom_call.1} parent=1 // pred_fallthru
      _
    // Predicated region
    $region26: #{tpu_custom_call.1} parent=1 // pred_check
      _
    $region27: #{tpu_custom_call.1} parent=1 // pred_check_branch
      %95 = sbr.rel (0) target = $region29
    $region28: #{tpu_custom_call.1} parent=1 // pred_region
      %97 = dma.done [#allocation4], 128
    $region29: #{tpu_custom_call.1} parent=1 // pred_fallthru
      _
    %98 = vsyncpa [#allocation3], 1
    %99 = vsyncpa [#allocation6], 1
    %100 = vsyncpa [#allocation4], 1

</llo_original>
